<compile_context>
chip_gen: v7x
topology: tpu7x:2x2x1
jax: 0.10.0
libtpu: 0.0.40
codegen_flags: <defaults>
</compile_context>

<pallas_src>
import jax
import jax.numpy as jnp
from jax.experimental import pallas as pl
from jax.experimental.pallas import tpu as pltpu


K_PAD = 8    # fc1 contraction dim padded 3 -> 8 with zeros
N_PAD = 8    # fc4 output dim padded 3 -> 8 with zeros (tiny writeback)
_SUB = 16    # batch-tile granularity (bf16 sublane packing = 16 rows)


def _round_up(v, m):
    return ((v + m - 1) // m) * m


def _fcnet_kernel(x_ref,
                  w1_ref, b1_ref,
                  w2_ref, b2_ref,
                  w3_ref, b3_ref,
                  w4_ref, b4_ref,
                  o_ref):
    # fc1 + ReLU : (TB,8)bf16 @ (8,64)bf16 -> f32, + (1,64)f32
    h = jnp.dot(x_ref[...], w1_ref[...],
                preferred_element_type=jnp.float32) + b1_ref[...]
    h = jnp.maximum(h, 0.0)

    # fc2 + ReLU : (TB,64) @ (64,128) + (1,128)
    h = jnp.dot(h.astype(jnp.bfloat16), w2_ref[...],
                preferred_element_type=jnp.float32) + b2_ref[...]
    h = jnp.maximum(h, 0.0)

    # fc3 + ReLU : (TB,128) @ (128,64) + (1,64)
    h = jnp.dot(h.astype(jnp.bfloat16), w3_ref[...],
                preferred_element_type=jnp.float32) + b3_ref[...]
    h = jnp.maximum(h, 0.0)

    # fc4 (no activation) : (TB,64) @ (64,8) + (1,8)   (N padded 3 -> 8)
    h = jnp.dot(h.astype(jnp.bfloat16), w4_ref[...],
                preferred_element_type=jnp.float32) + b4_ref[...]

    o_ref[...] = h


def fcnet_forward(x, params, *, batch_tile=1024):
    """x: (B, 3) float32 -> (B, 3) float32."""
    (w1, b1), (w2, b2), (w3, b3), (w4, b4) = params
    B = x.shape[0]

    # Batch tile: multiple of 16 (bf16 sublane packing), capped so the grid has
    # at least 2 steps when B allows it (keeps both v7x TensorCores busy).
    batch_tile = _round_up(max(int(batch_tile), _SUB), _SUB)
    half = _round_up(pl.cdiv(B, 2), _SUB)
    TB = min(batch_tile, max(_SUB, half))
    B_pad = _round_up(B, TB)
    grid = (B_pad // TB,)

    # Zero-pad degenerate dims in the wrapper (outside the kernel); x in bf16.
    xp = jnp.pad(x.astype(jnp.bfloat16),
                 ((0, B_pad - B), (0, K_PAD - x.shape[1])))
    w1p = jnp.pad(w1, ((0, K_PAD - w1.shape[0]), (0, 0))).astype(jnp.bfloat16)
    w2b = w2.astype(jnp.bfloat16)
    w3b = w3.astype(jnp.bfloat16)
    w4p = jnp.pad(w4, ((0, 0), (0, N_PAD - w4.shape[1]))).astype(jnp.bfloat16)
    b4p = jnp.pad(b4, ((0, 0), (0, N_PAD - b4.shape[1])))

    # Batch-tiled operands march along the grid; weights/biases keep a constant
    # block index so Pallas leaves them resident in VMEM across steps.
    row_spec = lambda ncols: pl.BlockSpec((TB, ncols), lambda i: (i, 0))
    const_spec = lambda shape: pl.BlockSpec(shape, lambda i: (0, 0))

    flops = 2 * B_pad * (K_PAD * 64 + 64 * 128 + 128 * 64 + 64 * N_PAD)
    bytes_accessed = (
        xp.size * 2 + B_pad * N_PAD * 4                       # bf16 x in, f32 out
        + (w1p.size + w2b.size + w3b.size + w4p.size) * 2     # bf16 weights
        + (b1.size + b2.size + b3.size + b4p.size) * 4        # f32 biases
    )

    out = pl.pallas_call(
        _fcnet_kernel,
        out_shape=jax.ShapeDtypeStruct((B_pad, N_PAD), jnp.float32),
        grid=grid,
        in_specs=[
            row_spec(K_PAD),
            const_spec(w1p.shape), const_spec(b1.shape),
            const_spec(w2b.shape), const_spec(b2.shape),
            const_spec(w3b.shape), const_spec(b3.shape),
            const_spec(w4p.shape), const_spec(b4p.shape),
        ],
        out_specs=pl.BlockSpec((TB, N_PAD), lambda i: (i, 0)),
        compiler_params=pltpu.CompilerParams(
            dimension_semantics=("parallel",)),
        cost_estimate=pl.CostEstimate(
            flops=flops, transcendentals=0,
            bytes_accessed=int(bytes_accessed)),
    )(xp, w1p, b1, w2b, b2, w3b, b3, w4p, b4p)

    return out[:B, :3]


def init_params(key):
    """Deterministic synthetic parameters matching nn.Linear shapes.

    PyTorch nn.Linear(in, out) has weight (out, in); we store the transpose
    (in, out) so the kernel can do x @ W. Biases are stored as (1, out) so
    they broadcast over batch rows.
    """
    dims = [(3, 64), (64, 128), (128, 64), (64, 3)]
    params = []
    for (din, dout) in dims:
        key, kw, kb = jax.random.split(key, 3)
        bound = 1.0 / jnp.sqrt(jnp.float32(din))  # PyTorch default U(-1/sqrt(in), 1/sqrt(in))
        w = jax.random.uniform(kw, (din, dout), jnp.float32, -bound, bound)
        b = jax.random.uniform(kb, (1, dout), jnp.float32, -bound, bound)
        params.append((w, b))
    return params


def fcnet_reference(x, params):
    """Plain-JAX f32 reference for verification."""
    (w1, b1), (w2, b2), (w3, b3), (w4, b4) = params
    h = jnp.maximum(x @ w1 + b1, 0.0)
    h = jnp.maximum(h @ w2 + b2, 0.0)
    h = jnp.maximum(h @ w3 + b3, 0.0)
    return h @ w4 + b4


if __name__ == "__main__":
    key = jax.random.PRNGKey(0)
    key, kx1, kx2 = jax.random.split(key, 3)
    params = init_params(key)

    # Small batch, single grid step.
    B1 = 8
    x1 = jax.random.normal(kx1, (B1, 3), jnp.float32)
    out1 = jax.block_until_ready(fcnet_forward(x1, params))
    ref1 = fcnet_reference(x1, params)
    assert out1.shape == (B1, 3)
    # bf16 matmul inputs (f32 accumulate) => relax tolerance vs f32 reference.
    assert jnp.allclose(out1, ref1, atol=2e-2, rtol=2e-2), "mismatch vs reference (B=8)"

    # Exercise the batch grid (multiple pipelined steps + batch padding).
    B2 = 20
    x2 = jax.random.normal(kx2, (B2, 3), jnp.float32)
    out2 = jax.block_until_ready(fcnet_forward(x2, params, batch_tile=16))
    ref2 = fcnet_reference(x2, params)
    assert out2.shape == (B2, 3)
    assert jnp.allclose(out2, ref2, atol=2e-2, rtol=2e-2), "mismatch vs reference (B=20)"

    print("KERNEL_OK")
</pallas_src>

<mosaic_0001>
module attributes {stable_mosaic.version = 11 : i64} {
  func.func @_fcnet_kernel(%arg0: i32, %arg1: memref<16x8xbf16, #tpu.memory_space<vmem>>, %arg2: memref<8x64xbf16, #tpu.memory_space<vmem>>, %arg3: memref<1x64xf32, #tpu.memory_space<vmem>>, %arg4: memref<64x128xbf16, #tpu.memory_space<vmem>>, %arg5: memref<1x128xf32, #tpu.memory_space<vmem>>, %arg6: memref<128x64xbf16, #tpu.memory_space<vmem>>, %arg7: memref<1x64xf32, #tpu.memory_space<vmem>>, %arg8: memref<64x8xbf16, #tpu.memory_space<vmem>>, %arg9: memref<1x8xf32, #tpu.memory_space<vmem>>, %arg10: memref<16x8xf32, #tpu.memory_space<vmem>>) attributes {dimension_semantics = [#tpu.dimension_semantics<parallel>], iteration_bounds = array<i64: 1>, scalar_prefetch = 0 : i64, scratch_operands = 0 : i64, tpu.core_type = #tpu.core_type<tc>, window_params = [{transform_indices = @transform_0, window_bounds = array<i64: 16, 8>}, {pipeline_mode = #tpu.pipeline_mode<synchronous>, transform_indices = @transform_1, window_bounds = array<i64: 8, 64>}, {pipeline_mode = #tpu.pipeline_mode<synchronous>, transform_indices = @transform_2, window_bounds = array<i64: 1, 64>}, {pipeline_mode = #tpu.pipeline_mode<synchronous>, transform_indices = @transform_3, window_bounds = array<i64: 64, 128>}, {pipeline_mode = #tpu.pipeline_mode<synchronous>, transform_indices = @transform_4, window_bounds = array<i64: 1, 128>}, {pipeline_mode = #tpu.pipeline_mode<synchronous>, transform_indices = @transform_5, window_bounds = array<i64: 128, 64>}, {pipeline_mode = #tpu.pipeline_mode<synchronous>, transform_indices = @transform_6, window_bounds = array<i64: 1, 64>}, {pipeline_mode = #tpu.pipeline_mode<synchronous>, transform_indices = @transform_7, window_bounds = array<i64: 64, 8>}, {pipeline_mode = #tpu.pipeline_mode<synchronous>, transform_indices = @transform_8, window_bounds = array<i64: 1, 8>}, {transform_indices = @transform_9, window_bounds = array<i64: 16, 8>}]} {
    %c0 = arith.constant 0 : index
    %c0_0 = arith.constant 0 : index
    %0 = vector.load %arg1[%c0, %c0_0] : memref<16x8xbf16, #tpu.memory_space<vmem>>, vector<16x8xbf16>
    %c0_1 = arith.constant 0 : index
    %c0_2 = arith.constant 0 : index
    %1 = vector.load %arg2[%c0_1, %c0_2] : memref<8x64xbf16, #tpu.memory_space<vmem>>, vector<8x64xbf16>
    %cst = arith.constant dense<0.000000e+00> : vector<16x64xf32>
    %2 = tpu.matmul %0, %1, %cst {dimension_numbers = #tpu.dot_dimension_numbers<[1], [0], [0], [1], [0, 0, 1, 1], [], []>} : vector<16x8xbf16>, vector<8x64xbf16>, vector<16x64xf32> -> vector<16x64xf32>
    %c0_3 = arith.constant 0 : index
    %c0_4 = arith.constant 0 : index
    %3 = vector.load %arg3[%c0_3, %c0_4] : memref<1x64xf32, #tpu.memory_space<vmem>>, vector<1x64xf32>
    %4 = vector.broadcast %3 : vector<1x64xf32> to vector<16x64xf32>
    %5 = arith.addf %2, %4 : vector<16x64xf32>
    %cst_5 = arith.constant 0.000000e+00 : f32
    %6 = vector.broadcast %cst_5 : f32 to vector<16x64xf32>
    %7 = arith.maximumf %5, %6 : vector<16x64xf32>
    %8 = arith.truncf %7 : vector<16x64xf32> to vector<16x64xbf16>
    %c0_6 = arith.constant 0 : index
    %c0_7 = arith.constant 0 : index
    %9 = vector.load %arg4[%c0_6, %c0_7] : memref<64x128xbf16, #tpu.memory_space<vmem>>, vector<64x128xbf16>
    %cst_8 = arith.constant dense<0.000000e+00> : vector<16x128xf32>
    %10 = tpu.matmul %8, %9, %cst_8 {dimension_numbers = #tpu.dot_dimension_numbers<[1], [0], [0], [1], [0, 0, 1, 1], [], []>} : vector<16x64xbf16>, vector<64x128xbf16>, vector<16x128xf32> -> vector<16x128xf32>
    %c0_9 = arith.constant 0 : index
    %c0_10 = arith.constant 0 : index
    %11 = vector.load %arg5[%c0_9, %c0_10] : memref<1x128xf32, #tpu.memory_space<vmem>>, vector<1x128xf32>
    %12 = vector.broadcast %11 : vector<1x128xf32> to vector<16x128xf32>
    %13 = arith.addf %10, %12 : vector<16x128xf32>
    %cst_11 = arith.constant 0.000000e+00 : f32
    %14 = vector.broadcast %cst_11 : f32 to vector<16x128xf32>
    %15 = arith.maximumf %13, %14 : vector<16x128xf32>
    %16 = arith.truncf %15 : vector<16x128xf32> to vector<16x128xbf16>
    %c0_12 = arith.constant 0 : index
    %c0_13 = arith.constant 0 : index
    %17 = vector.load %arg6[%c0_12, %c0_13] : memref<128x64xbf16, #tpu.memory_space<vmem>>, vector<128x64xbf16>
    %cst_14 = arith.constant dense<0.000000e+00> : vector<16x64xf32>
    %18 = tpu.matmul %16, %17, %cst_14 {dimension_numbers = #tpu.dot_dimension_numbers<[1], [0], [0], [1], [0, 0, 1, 1], [], []>} : vector<16x128xbf16>, vector<128x64xbf16>, vector<16x64xf32> -> vector<16x64xf32>
    %c0_15 = arith.constant 0 : index
    %c0_16 = arith.constant 0 : index
    %19 = vector.load %arg7[%c0_15, %c0_16] : memref<1x64xf32, #tpu.memory_space<vmem>>, vector<1x64xf32>
    %20 = vector.broadcast %19 : vector<1x64xf32> to vector<16x64xf32>
    %21 = arith.addf %18, %20 : vector<16x64xf32>
    %cst_17 = arith.constant 0.000000e+00 : f32
    %22 = vector.broadcast %cst_17 : f32 to vector<16x64xf32>
    %23 = arith.maximumf %21, %22 : vector<16x64xf32>
    %24 = arith.truncf %23 : vector<16x64xf32> to vector<16x64xbf16>
    %c0_18 = arith.constant 0 : index
    %c0_19 = arith.constant 0 : index
    %25 = vector.load %arg8[%c0_18, %c0_19] : memref<64x8xbf16, #tpu.memory_space<vmem>>, vector<64x8xbf16>
    %cst_20 = arith.constant dense<0.000000e+00> : vector<16x8xf32>
    %26 = tpu.matmul %24, %25, %cst_20 {dimension_numbers = #tpu.dot_dimension_numbers<[1], [0], [0], [1], [0, 0, 1, 1], [], []>} : vector<16x64xbf16>, vector<64x8xbf16>, vector<16x8xf32> -> vector<16x8xf32>
    %c0_21 = arith.constant 0 : index
    %c0_22 = arith.constant 0 : index
    %27 = vector.load %arg9[%c0_21, %c0_22] : memref<1x8xf32, #tpu.memory_space<vmem>>, vector<1x8xf32>
    %28 = vector.broadcast %27 : vector<1x8xf32> to vector<16x8xf32>
    %29 = arith.addf %26, %28 : vector<16x8xf32>
    %c0_23 = arith.constant 0 : index
    %c0_24 = arith.constant 0 : index
    %30 = vector.load %arg10[%c0_23, %c0_24] : memref<16x8xf32, #tpu.memory_space<vmem>>, vector<16x8xf32>
    tpu.vector_store %arg10[%c0_23, %c0_24], %29 {strides = array<i32>} : memref<16x8xf32, #tpu.memory_space<vmem>>, vector<16x8xf32>,
    return
  }
  func.func @transform_0(%arg0: i32) -> (i32, i32) {
    %c0_i32 = arith.constant 0 : i32
    %c0_i32_0 = arith.constant 0 : i32
    return %arg0, %c0_i32 : i32, i32
  }
  func.func @transform_1(%arg0: i32) -> (i32, i32) {
    %c0_i32 = arith.constant 0 : i32
    %c0_i32_0 = arith.constant 0 : i32
    %c0_i32_1 = arith.constant 0 : i32
    return %c0_i32, %c0_i32_0 : i32, i32
  }
  func.func @transform_2(%arg0: i32) -> (i32, i32) {
    %c0_i32 = arith.constant 0 : i32
    %c0_i32_0 = arith.constant 0 : i32
    %c0_i32_1 = arith.constant 0 : i32
    return %c0_i32, %c0_i32_0 : i32, i32
  }
  func.func @transform_3(%arg0: i32) -> (i32, i32) {
    %c0_i32 = arith.constant 0 : i32
    %c0_i32_0 = arith.constant 0 : i32
    %c0_i32_1 = arith.constant 0 : i32
    return %c0_i32, %c0_i32_0 : i32, i32
  }
  func.func @transform_4(%arg0: i32) -> (i32, i32) {
    %c0_i32 = arith.constant 0 : i32
    %c0_i32_0 = arith.constant 0 : i32
    %c0_i32_1 = arith.constant 0 : i32
    return %c0_i32, %c0_i32_0 : i32, i32
  }
  func.func @transform_5(%arg0: i32) -> (i32, i32) {
    %c0_i32 = arith.constant 0 : i32
    %c0_i32_0 = arith.constant 0 : i32
    %c0_i32_1 = arith.constant 0 : i32
    return %c0_i32, %c0_i32_0 : i32, i32
  }
  func.func @transform_6(%arg0: i32) -> (i32, i32) {
    %c0_i32 = arith.constant 0 : i32
    %c0_i32_0 = arith.constant 0 : i32
    %c0_i32_1 = arith.constant 0 : i32
    return %c0_i32, %c0_i32_0 : i32, i32
  }
  func.func @transform_7(%arg0: i32) -> (i32, i32) {
    %c0_i32 = arith.constant 0 : i32
    %c0_i32_0 = arith.constant 0 : i32
    %c0_i32_1 = arith.constant 0 : i32
    return %c0_i32, %c0_i32_0 : i32, i32
  }
  func.func @transform_8(%arg0: i32) -> (i32, i32) {
    %c0_i32 = arith.constant 0 : i32
    %c0_i32_0 = arith.constant 0 : i32
    %c0_i32_1 = arith.constant 0 : i32
    return %c0_i32, %c0_i32_0 : i32, i32
  }
  func.func @transform_9(%arg0: i32) -> (i32, i32) {
    %c0_i32 = arith.constant 0 : i32
    %c0_i32_0 = arith.constant 0 : i32
    return %arg0, %c0_i32 : i32, i32
  }
}

</mosaic_0001>

<llo_original>
// kernel: tpu_custom_call.1
$region0: #{tpu_custom_call.1}
  #allocation0 [shape = 'u32[]', space=smem, size = 0x4, offset = 0x4, fixed_abs, tag = 'smem constant byte address 0x4 - core index']
  #allocation1 [shape = 'u32[144,128]{1,0:T(1,128)}', space=vmem, size = 0x12000, scoped, tag = 'internal scratch']
  %s0 = inlined_call_operand.vmem [shape: bf16[16,8], index: 0, kind: input, shape index: {}]
  %s1 = inlined_call_operand.vmem [shape: bf16[8,64], index: 1, kind: input, shape index: {}]
  %s2 = inlined_call_operand.vmem [shape: f32[1,64], index: 2, kind: input, shape index: {}]
  %s3 = inlined_call_operand.vmem [shape: bf16[64,128], index: 3, kind: input, shape index: {}]
  %s4 = inlined_call_operand.vmem [shape: f32[1,128], index: 4, kind: input, shape index: {}]
  %s5 = inlined_call_operand.vmem [shape: bf16[128,64], index: 5, kind: input, shape index: {}]
  %s6 = inlined_call_operand.vmem [shape: f32[1,64], index: 6, kind: input, shape index: {}]
  %s7 = inlined_call_operand.vmem [shape: bf16[64,8], index: 7, kind: input, shape index: {}]
  %s8 = inlined_call_operand.vmem [shape: f32[1,8], index: 8, kind: input, shape index: {}]
  %s9 = inlined_call_operand.vmem [shape: f32[16,8], index: 9, kind: output, shape index: {}]
  %s10 = sld [smem:[#allocation0]]
  $region46: #{tpu_custom_call.1} parent=0
    _
  %s12 = ssub.s32 1, %s10
  %s13 = scalar_select 0, %s12, %s10
  // Predicated region
  $region2: #{tpu_custom_call.1} parent=0 // pred_check
    _
  $region3: #{tpu_custom_call.1} parent=0 // pred_check_branch
    %15 = sbr.rel (0) target = $region5
  $region4: #{tpu_custom_call.1} parent=0 // pred_region
    _
  $region5: #{tpu_custom_call.1} parent=0 // pred_fallthru
    _
  // Predicated region
  $region6: #{tpu_custom_call.1} parent=0 // pred_check
    _
  $region7: #{tpu_custom_call.1} parent=0 // pred_check_branch
    %17 = sbr.rel (0) target = $region9
  $region8: #{tpu_custom_call.1} parent=0 // pred_region
    _
  $region9: #{tpu_custom_call.1} parent=0 // pred_fallthru
    _
  // Predicated region
  $region10: #{tpu_custom_call.1} parent=0 // pred_check
    _
  $region11: #{tpu_custom_call.1} parent=0 // pred_check_branch
    %19 = sbr.rel (0) target = $region13
  $region12: #{tpu_custom_call.1} parent=0 // pred_region
    _
  $region13: #{tpu_custom_call.1} parent=0 // pred_fallthru
    _
  // Predicated region
  $region14: #{tpu_custom_call.1} parent=0 // pred_check
    _
  $region15: #{tpu_custom_call.1} parent=0 // pred_check_branch
    %21 = sbr.rel (0) target = $region17
  $region16: #{tpu_custom_call.1} parent=0 // pred_region
    _
  $region17: #{tpu_custom_call.1} parent=0 // pred_fallthru
    _
  // Predicated region
  $region18: #{tpu_custom_call.1} parent=0 // pred_check
    _
  $region19: #{tpu_custom_call.1} parent=0 // pred_check_branch
    %23 = sbr.rel (0) target = $region21
  $region20: #{tpu_custom_call.1} parent=0 // pred_region
    _
  $region21: #{tpu_custom_call.1} parent=0 // pred_fallthru
    _
  // Predicated region
  $region22: #{tpu_custom_call.1} parent=0 // pred_check
    _
  $region23: #{tpu_custom_call.1} parent=0 // pred_check_branch
    %25 = sbr.rel (0) target = $region25
  $region24: #{tpu_custom_call.1} parent=0 // pred_region
    _
  $region25: #{tpu_custom_call.1} parent=0 // pred_fallthru
    _
  // Predicated region
  $region26: #{tpu_custom_call.1} parent=0 // pred_check
    _
  $region27: #{tpu_custom_call.1} parent=0 // pred_check_branch
    %27 = sbr.rel (0) target = $region29
  $region28: #{tpu_custom_call.1} parent=0 // pred_region
    _
  $region29: #{tpu_custom_call.1} parent=0 // pred_fallthru
    _
  // Predicated region
  $region30: #{tpu_custom_call.1} parent=0 // pred_check
    _
  $region31: #{tpu_custom_call.1} parent=0 // pred_check_branch
    %29 = sbr.rel (0) target = $region33
  $region32: #{tpu_custom_call.1} parent=0 // pred_region
    _
  $region33: #{tpu_custom_call.1} parent=0 // pred_fallthru
    _
  // Predicated region
  $region34: #{tpu_custom_call.1} parent=0 // pred_check
    _
  $region35: #{tpu_custom_call.1} parent=0 // pred_check_branch
    %31 = sbr.rel (0) target = $region37
  $region36: #{tpu_custom_call.1} parent=0 // pred_region
    _
  $region37: #{tpu_custom_call.1} parent=0 // pred_fallthru
    _
  %v33 = vld [vmem:[%s0] sm:$0xf]
  %v34 = vld [vmem:[%s0 + $0x4] sm:$0xf]
  %v35 = vld [vmem:[%s1] sm:$0xf]
  %v36 = vld [vmem:[%s2] sm:$0x1]
  %v38 = vlaneseq
  %v39 = vshrl.u32 %v38, 7
  %v40 = vsub.s32 0, %v39
  %v41 = vrot.slane %v36, %v40
  %v45 = vunpack.c.l.b16 %v33
  %v46 = vunpack.c.l.b16 %v34
  %v47 = vpack.c.b16 %v46, %v45
  %vm48 = vcmask 64512
  %v50 = vsel %vm48, %v47, 0
  %vm52 = vcmask 1043456
  %v54 = vsel %vm52, %v35, 0
  %56 = vmatprep.subr.bf16.mxu0 0
  %57 = vmatpush1.bf16.msra.mxu0 %v54
  %58 = vmatprep.subr.bf16.mxu0 0
  %59 = vmatpush1.bf16.msra.mxu0 0
  %60 = vmatprep.subr.bf16.mxu0 0
  %61 = vmatpush1.bf16.msra.mxu0 0
  %62 = vmatprep.subr.bf16.mxu0 0
  %63 = vmatpush1.bf16.msra.mxu0 0
  %64 = vmatprep.subr.bf16.mxu0 0
  %65 = vmatpush1.bf16.msra.mxu0 0
  %66 = vmatprep.subr.bf16.mxu0 0
  %67 = vmatpush1.bf16.msra.mxu0 0
  %68 = vmatprep.subr.bf16.mxu0 0
  %69 = vmatpush1.bf16.msra.mxu0 0
  %70 = vmatprep.subr.bf16.mxu0 0
  %71 = vmatpush1.bf16.msra.mxu0 0
  %72 = vmatprep.subr.bf16.mxu0 0
  %73 = vmatpush1.bf16.msra.mxu0 0
  %74 = vmatprep.subr.bf16.mxu0 0
  %75 = vmatpush1.bf16.msra.mxu0 0
  %76 = vmatprep.subr.bf16.mxu0 0
  %77 = vmatpush1.bf16.msra.mxu0 0
  %78 = vmatprep.subr.bf16.mxu0 0
  %79 = vmatpush1.bf16.msra.mxu0 0
  %80 = vmatprep.subr.bf16.mxu0 0
  %81 = vmatpush1.bf16.msra.mxu0 0
  %82 = vmatprep.subr.bf16.mxu0 0
  %83 = vmatpush1.bf16.msra.mxu0 0
  %84 = vmatprep.subr.bf16.mxu0 0
  %85 = vmatpush1.bf16.msra.mxu0 0
  %86 = vmatprep.subr.bf16.mxu0 0
  %87 = vmatpush1.bf16.msra.mxu0 0
  %88 = vmatprep.mubr.bf16.mxu0 0
  %89 = vmatmul.mubr.bf16.gmra.mrb[0].mxu0 %v50
  %v90 = vpop.f32.mrb[0].mxu0
  %v91 = vadd.f32 %v41, %v90
  %v92 = vpop.f32.mrb[0].mxu0
  %v93 = vpop.f32.mrb[0].mxu0
  %v94 = vadd.f32 %v41, %v93
  %v95 = vpop.f32.mrb[0].mxu0
  %96 = vdwg.mxu0
  %v97 = vmax.f32 %v91, 0.0
  %v98 = vmax.f32 %v94, 0.0
  %v99 = vpack.c.bf16 %v98, %v97
  %v100 = vld [vmem:[%s3] sm:$0xf]
  %v101 = vld [vmem:[%s3 + $0x4] sm:$0xf]
  %v102 = vld [vmem:[%s3 + $0x8] sm:$0xf]
  %v103 = vld [vmem:[%s3 + $0xc] sm:$0xf]
  %v104 = vld [vmem:[%s3 + $0x10] sm:$0xf]
  %v105 = vld [vmem:[%s3 + $0x14] sm:$0xf]
  %v106 = vld [vmem:[%s3 + $0x18] sm:$0xf]
  %v107 = vld [vmem:[%s3 + $0x1c] sm:$0xf]
  %v108 = vld [vmem:[%s4] sm:$0x1]
  %v110 = vlaneseq
  %v111 = vshrl.u32 %v110, 7
  %v112 = vsub.s32 0, %v111
  %v113 = vrot.slane %v108, %v112
  %v123 = vunpack.c.l.b16 %v100
  %v124 = vunpack.c.l.b16 %v101
  %v125 = vunpack.c.l.b16 %v102
  %v126 = vunpack.c.l.b16 %v103
  %v127 = vunpack.c.l.b16 %v104
  %v128 = vunpack.c.l.b16 %v105
  %v129 = vunpack.c.l.b16 %v106
  %v130 = vunpack.c.l.b16 %v107
  %v131 = vpack.c.b16 %v124, %v123
  %v132 = vpack.c.b16 %v126, %v125
  %v133 = vpack.c.b16 %v128, %v127
  %v134 = vpack.c.b16 %v130, %v129
  %vm139 = vcmask 523264
  %v141 = vsel %vm139, %v99, 0
  %143 = vmatprep.subr.bf16.mxu0 0
  %144 = vmatpush1.bf16.msra.mxu0 %v131
  %145 = vmatprep.subr.bf16.mxu0 0
  %146 = vmatpush1.bf16.msra.mxu0 %v132
  %147 = vmatprep.subr.bf16.mxu0 0
  %148 = vmatpush1.bf16.msra.mxu0 %v133
  %149 = vmatprep.subr.bf16.mxu0 0
  %150 = vmatpush1.bf16.msra.mxu0 %v134
  %151 = vmatprep.subr.bf16.mxu0 0
  %152 = vmatpush1.bf16.msra.mxu0 0
  %153 = vmatprep.subr.bf16.mxu0 0
  %154 = vmatpush1.bf16.msra.mxu0 0
  %155 = vmatprep.subr.bf16.mxu0 0
  %156 = vmatpush1.bf16.msra.mxu0 0
  %157 = vmatprep.subr.bf16.mxu0 0
  %158 = vmatpush1.bf16.msra.mxu0 0
  %159 = vmatprep.subr.bf16.mxu0 0
  %160 = vmatpush1.bf16.msra.mxu0 0
  %161 = vmatprep.subr.bf16.mxu0 0
  %162 = vmatpush1.bf16.msra.mxu0 0
  %163 = vmatprep.subr.bf16.mxu0 0
  %164 = vmatpush1.bf16.msra.mxu0 0
  %165 = vmatprep.subr.bf16.mxu0 0
  %166 = vmatpush1.bf16.msra.mxu0 0
  %167 = vmatprep.subr.bf16.mxu0 0
  %168 = vmatpush1.bf16.msra.mxu0 0
  %169 = vmatprep.subr.bf16.mxu0 0
  %170 = vmatpush1.bf16.msra.mxu0 0
  %171 = vmatprep.subr.bf16.mxu0 0
  %172 = vmatpush1.bf16.msra.mxu0 0
  %173 = vmatprep.subr.bf16.mxu0 0
  %174 = vmatpush1.bf16.msra.mxu0 0
  %175 = vmatprep.mubr.bf16.mxu0 0
  %176 = vmatmul.mubr.bf16.gmra.mrb[0].mxu0 %v141
  %v177 = vpop.f32.mrb[0].mxu0
  %v178 = vadd.f32 %v113, %v177
  %v179 = vpop.f32.mrb[0].mxu0
  %v180 = vpop.f32.mrb[0].mxu0
  %v181 = vadd.f32 %v113, %v180
  %v182 = vpop.f32.mrb[0].mxu0
  %183 = vdwg.mxu0
  %v184 = vmax.f32 %v178, 0.0
  %v185 = vmax.f32 %v181, 0.0
  %v186 = vpack.c.bf16 %v185, %v184
  %v187 = vld [vmem:[%s5] sm:$0xf]
  %v188 = vld [vmem:[%s5 + $0x4] sm:$0xf]
  %v189 = vld [vmem:[%s5 + $0x8] sm:$0xf]
  %v190 = vld [vmem:[%s5 + $0xc] sm:$0xf]
  %v191 = vld [vmem:[%s5 + $0x10] sm:$0xf]
  %v192 = vld [vmem:[%s5 + $0x14] sm:$0xf]
  %v193 = vld [vmem:[%s5 + $0x18] sm:$0xf]
  %v194 = vld [vmem:[%s5 + $0x1c] sm:$0xf]
  %v195 = vld [vmem:[%s5 + $0x20] sm:$0xf]
  %v196 = vld [vmem:[%s5 + $0x24] sm:$0xf]
  %v197 = vld [vmem:[%s5 + $0x28] sm:$0xf]
  %v198 = vld [vmem:[%s5 + $0x2c] sm:$0xf]
  %v199 = vld [vmem:[%s5 + $0x30] sm:$0xf]
  %v200 = vld [vmem:[%s5 + $0x34] sm:$0xf]
  %v201 = vld [vmem:[%s5 + $0x38] sm:$0xf]
  %v202 = vld [vmem:[%s5 + $0x3c] sm:$0xf]
  %v203 = vld [vmem:[%s6] sm:$0x1]
  %v205 = vlaneseq
  %v206 = vshrl.u32 %v205, 7
  %v207 = vsub.s32 0, %v206
  %v208 = vrot.slane %v203, %v207
  %v226 = vunpack.c.l.b16 %v187
  %v227 = vunpack.c.l.b16 %v188
  %v228 = vunpack.c.l.b16 %v189
  %v229 = vunpack.c.l.b16 %v190
  %v230 = vunpack.c.l.b16 %v191
  %v231 = vunpack.c.l.b16 %v192
  %v232 = vunpack.c.l.b16 %v193
  %v233 = vunpack.c.l.b16 %v194
  %v234 = vunpack.c.l.b16 %v195
  %v235 = vunpack.c.l.b16 %v196
  %v236 = vunpack.c.l.b16 %v197
  %v237 = vunpack.c.l.b16 %v198
  %v238 = vunpack.c.l.b16 %v199
  %v239 = vunpack.c.l.b16 %v200
  %v240 = vunpack.c.l.b16 %v201
  %v241 = vunpack.c.l.b16 %v202
  %v242 = vpack.c.b16 %v227, %v226
  %v243 = vpack.c.b16 %v229, %v228
  %v244 = vpack.c.b16 %v231, %v230
  %v245 = vpack.c.b16 %v233, %v232
  %v246 = vpack.c.b16 %v235, %v234
  %v247 = vpack.c.b16 %v237, %v236
  %v248 = vpack.c.b16 %v239, %v238
  %v249 = vpack.c.b16 %v241, %v240
  %258 = vmatprep.subr.bf16.mxu0 0
  %259 = vmatpush1.bf16.msra.mxu0 %v242
  %260 = vmatprep.subr.bf16.mxu0 0
  %261 = vmatpush1.bf16.msra.mxu0 %v243
  %262 = vmatprep.subr.bf16.mxu0 0
  %263 = vmatpush1.bf16.msra.mxu0 %v244
  %264 = vmatprep.subr.bf16.mxu0 0
  %265 = vmatpush1.bf16.msra.mxu0 %v245
  %266 = vmatprep.subr.bf16.mxu0 0
  %267 = vmatpush1.bf16.msra.mxu0 %v246
  %268 = vmatprep.subr.bf16.mxu0 0
  %269 = vmatpush1.bf16.msra.mxu0 %v247
  %270 = vmatprep.subr.bf16.mxu0 0
  %271 = vmatpush1.bf16.msra.mxu0 %v248
  %272 = vmatprep.subr.bf16.mxu0 0
  %273 = vmatpush1.bf16.msra.mxu0 %v249
  %274 = vmatprep.subr.bf16.mxu0 0
  %275 = vmatpush1.bf16.msra.mxu0 0
  %276 = vmatprep.subr.bf16.mxu0 0
  %277 = vmatpush1.bf16.msra.mxu0 0
  %278 = vmatprep.subr.bf16.mxu0 0
  %279 = vmatpush1.bf16.msra.mxu0 0
  %280 = vmatprep.subr.bf16.mxu0 0
  %281 = vmatpush1.bf16.msra.mxu0 0
  %282 = vmatprep.subr.bf16.mxu0 0
  %283 = vmatpush1.bf16.msra.mxu0 0
  %284 = vmatprep.subr.bf16.mxu0 0
  %285 = vmatpush1.bf16.msra.mxu0 0
  %286 = vmatprep.subr.bf16.mxu0 0
  %287 = vmatpush1.bf16.msra.mxu0 0
  %288 = vmatprep.subr.bf16.mxu0 0
  %289 = vmatpush1.bf16.msra.mxu0 0
  %290 = vmatprep.mubr.bf16.mxu0 0
  %291 = vmatmul.mubr.bf16.gmra.mrb[0].mxu0 %v186
  %v292 = vpop.f32.mrb[0].mxu0
  %v293 = vadd.f32 %v208, %v292
  %v294 = vpop.f32.mrb[0].mxu0
  %v295 = vpop.f32.mrb[0].mxu0
  %v296 = vadd.f32 %v208, %v295
  %v297 = vpop.f32.mrb[0].mxu0
  %298 = vdwg.mxu0
  %v299 = vmax.f32 %v293, 0.0
  %v300 = vmax.f32 %v296, 0.0
  %v301 = vpack.c.bf16 %v300, %v299
  %v302 = vld [vmem:[%s7] sm:$0xf]
  %v303 = vld [vmem:[%s7 + $0x4] sm:$0xf]
  %v304 = vld [vmem:[%s7 + $0x8] sm:$0xf]
  %v305 = vld [vmem:[%s7 + $0xc] sm:$0xf]
  %v306 = vld [vmem:[%s7 + $0x10] sm:$0xf]
  %v307 = vld [vmem:[%s7 + $0x14] sm:$0xf]
  %v308 = vld [vmem:[%s7 + $0x18] sm:$0xf]
  %v309 = vld [vmem:[%s7 + $0x1c] sm:$0xf]
  %v310 = vld [vmem:[%s8] sm:$0x1]
  %v312 = vlaneseq
  %v313 = vshrl.u32 %v312, 7
  %v314 = vsub.s32 0, %v313
  %v315 = vrot.slane %v310, %v314
  %v325 = vunpack.c.l.b16 %v302
  %v326 = vunpack.c.l.b16 %v303
  %v327 = vunpack.c.l.b16 %v304
  %v328 = vunpack.c.l.b16 %v305
  %v329 = vunpack.c.l.b16 %v306
  %v330 = vunpack.c.l.b16 %v307
  %v331 = vunpack.c.l.b16 %v308
  %v332 = vunpack.c.l.b16 %v309
  %v333 = vpack.c.b16 %v326, %v325
  %v334 = vpack.c.b16 %v328, %v327
  %v335 = vpack.c.b16 %v330, %v329
  %v336 = vpack.c.b16 %v332, %v331
  %v342 = vsel %vm139, %v301, 0
  %344 = vmatprep.subr.bf16.mxu0 0
  %345 = vmatpush1.bf16.msra.mxu0 %v333
  %346 = vmatprep.subr.bf16.mxu0 0
  %347 = vmatpush1.bf16.msra.mxu0 %v334
  %348 = vmatprep.subr.bf16.mxu0 0
  %349 = vmatpush1.bf16.msra.mxu0 %v335
  %350 = vmatprep.subr.bf16.mxu0 0
  %351 = vmatpush1.bf16.msra.mxu0 %v336
  %352 = vmatprep.subr.bf16.mxu0 0
  %353 = vmatpush1.bf16.msra.mxu0 0
  %354 = vmatprep.subr.bf16.mxu0 0
  %355 = vmatpush1.bf16.msra.mxu0 0
  %356 = vmatprep.subr.bf16.mxu0 0
  %357 = vmatpush1.bf16.msra.mxu0 0
  %358 = vmatprep.subr.bf16.mxu0 0
  %359 = vmatpush1.bf16.msra.mxu0 0
  %360 = vmatprep.subr.bf16.mxu0 0
  %361 = vmatpush1.bf16.msra.mxu0 0
  %362 = vmatprep.subr.bf16.mxu0 0
  %363 = vmatpush1.bf16.msra.mxu0 0
  %364 = vmatprep.subr.bf16.mxu0 0
  %365 = vmatpush1.bf16.msra.mxu0 0
  %366 = vmatprep.subr.bf16.mxu0 0
  %367 = vmatpush1.bf16.msra.mxu0 0
  %368 = vmatprep.subr.bf16.mxu0 0
  %369 = vmatpush1.bf16.msra.mxu0 0
  %370 = vmatprep.subr.bf16.mxu0 0
  %371 = vmatpush1.bf16.msra.mxu0 0
  %372 = vmatprep.subr.bf16.mxu0 0
  %373 = vmatpush1.bf16.msra.mxu0 0
  %374 = vmatprep.subr.bf16.mxu0 0
  %375 = vmatpush1.bf16.msra.mxu0 0
  %376 = vmatprep.mubr.bf16.mxu0 0
  %377 = vmatmul.mubr.bf16.gmra.mrb[0].mxu0 %v342
  %v378 = vpop.f32.mrb[0].mxu0
  %v379 = vadd.f32 %v315, %v378
  %v380 = vpop.f32.mrb[0].mxu0
  %v381 = vpop.f32.mrb[0].mxu0
  %v382 = vadd.f32 %v315, %v381
  %v383 = vpop.f32.mrb[0].mxu0
  %384 = vdwg.mxu0
  %385 = vst.msk [vmem:[%s9] sm:$0xff] %vm48, %v379
  %386 = vst.msk [vmem:[%s9 + $0x8] sm:$0xff] %vm48, %v382
  // Predicated region
  $region38: #{tpu_custom_call.1} parent=0 // pred_check
    _
  $region39: #{tpu_custom_call.1} parent=0 // pred_check_branch
    %388 = sbr.rel (0) target = $region41
  $region40: #{tpu_custom_call.1} parent=0 // pred_region
    _
  $region41: #{tpu_custom_call.1} parent=0 // pred_fallthru
    _
  // Predicated region
  $region42: #{tpu_custom_call.1} parent=0 // pred_check
    _
  $region43: #{tpu_custom_call.1} parent=0 // pred_check_branch
    %390 = sbr.rel (0) target = $region45
  $region44: #{tpu_custom_call.1} parent=0 // pred_region
    _
  $region45: #{tpu_custom_call.1} parent=0 // pred_fallthru
    _

</llo_original>
